<compile_context>
chip_gen: v5e
topology: v5e:2x2
jax: 0.10.0
libtpu: 0.0.40
codegen_flags: <defaults>
</compile_context>

<pallas_src>
import functools

import jax
import jax.numpy as jnp
from jax.experimental import pallas as pl
from jax.experimental.pallas import tpu as pltpu

N_HIDDEN = 10


def qnet_kernel(obs_ref, act_ref, w1o_ref, w1a_ref, b1_ref, w2_ref, b2_ref,
                w3_ref, b3_ref, out_ref):
    # Layer 1: (H, obs_dim) @ (obs_dim, TB) + (H, act_dim) @ (act_dim, TB) + (H, 1)
    # == transpose of cat([obs, act]) @ W1 + b1, computed batch-on-lanes.
    h1 = (jnp.dot(w1o_ref[...], obs_ref[...], preferred_element_type=jnp.float32)
          + jnp.dot(w1a_ref[...], act_ref[...], preferred_element_type=jnp.float32)
          + b1_ref[...])
    h1 = jnp.maximum(h1, 0.0)
    # Layer 2: (H, H) @ (H, TB) + (H, 1), then ReLU.
    h2 = jnp.dot(w2_ref[...], h1, preferred_element_type=jnp.float32) + b2_ref[...]
    h2 = jnp.maximum(h2, 0.0)
    # Layer 3: (1, H) @ (H, TB) + scalar -> lane-dense (1, TB) store.
    y = jnp.dot(w3_ref[...], h2, preferred_element_type=jnp.float32) + b3_ref[0]
    out_ref[...] = y.astype(out_ref.dtype)


def _round_up(x, m):
    return -(-x // m) * m


@functools.partial(jax.jit, static_argnames=("block_batch",))
def qnet_forward(action, obs, params, *, block_batch=8192):
    """Equivalent of QNet.forward(action, obs). Returns (B, 1) float32."""
    if block_batch % 128 != 0:
        raise ValueError("block_batch must be a multiple of 128")
    w1, b1, w2, b2, w3, b3 = params
    B, obs_dim = obs.shape
    act_dim = action.shape[1]
    d_in = obs_dim + act_dim

    # One-time tiny reshuffles (fused by XLA; negligible next to the batch DMA).
    obs_t = obs.T                        # (obs_dim, B)
    act_t = action.T                     # (act_dim, B)
    w1o = w1[:obs_dim].T                 # (H, obs_dim)
    w1a = w1[obs_dim:].T                 # (H, act_dim)
    b1c = b1.reshape(N_HIDDEN, 1)        # (H, 1)
    w2t = w2.T                           # (H, H)
    b2c = b2.reshape(N_HIDDEN, 1)        # (H, 1)
    w3t = w3.T                           # (1, H)
    b3s = b3.reshape(1)                  # scalar -> SMEM

    # Batch tile: a multiple of 128 (or the full small batch). For B > 256 aim for
    # >=2 balanced grid steps so v7x's two TensorCores both get work.
    if B <= 256:
        tb = B if B <= block_batch else block_batch
    else:
        tb = min(block_batch, _round_up(pl.cdiv(B, 2), 128))
    grid = (pl.cdiv(B, tb),)

    batch_spec = lambda d: pl.BlockSpec((d, tb), lambda i: (0, i))
    const_spec = lambda shape: pl.BlockSpec(shape, lambda i: (0, 0))

    flops = 2 * B * (d_in * N_HIDDEN + N_HIDDEN * N_HIDDEN + N_HIDDEN)
    bytes_accessed = 4 * (B * (d_in + 1) + w1.size + b1.size + w2.size + b2.size
                          + w3.size + b3.size)

    out = pl.pallas_call(
        qnet_kernel,
        out_shape=jax.ShapeDtypeStruct((1, B), jnp.float32),
        grid=grid,
        in_specs=[
            batch_spec(obs_dim),                               # obs_t  (obs_dim, B)
            batch_spec(act_dim),                               # act_t  (act_dim, B)
            const_spec((N_HIDDEN, obs_dim)),                   # w1o
            const_spec((N_HIDDEN, act_dim)),                   # w1a
            const_spec((N_HIDDEN, 1)),                         # b1
            const_spec((N_HIDDEN, N_HIDDEN)),                  # w2
            const_spec((N_HIDDEN, 1)),                         # b2
            const_spec((1, N_HIDDEN)),                         # w3
            pl.BlockSpec(memory_space=pltpu.MemorySpace.SMEM), # b3 (scalar)
        ],
        out_specs=pl.BlockSpec((1, tb), lambda i: (0, i)),
        compiler_params=pltpu.CompilerParams(
            dimension_semantics=("parallel",),
            vmem_limit_bytes=32 * 1024 * 1024),
        cost_estimate=pl.CostEstimate(
            flops=int(flops), transcendentals=0, bytes_accessed=int(bytes_accessed)),
    )(obs_t, act_t, w1o, w1a, b1c, w2t, b2c, w3t, b3s)

    # (1, B) -> (B, 1): contiguous, order-preserving, effectively free.
    return out.reshape(B, 1)


def init_params(key, obs_dim, act_dim):
    """Deterministic init mimicking PyTorch's default Linear init U[-1/sqrt(fan_in), 1/sqrt(fan_in)].

    Weights are stored as (in_features, out_features) so each layer is y = x @ W + b.
    """
    layer_dims = [(obs_dim + act_dim, N_HIDDEN), (N_HIDDEN, N_HIDDEN), (N_HIDDEN, 1)]
    params = []
    for fin, fout in layer_dims:
        key, kw, kb = jax.random.split(key, 3)
        bound = 1.0 / float(fin) ** 0.5
        w = jax.random.uniform(kw, (fin, fout), jnp.float32, -bound, bound)
        b = jax.random.uniform(kb, (1, fout), jnp.float32, -bound, bound)
        params += [w, b]
    return params


def qnet_reference(action, obs, params):
    x = jnp.concatenate([obs, action], axis=1)
    w1, b1, w2, b2, w3, b3 = params
    h1 = jnp.maximum(x @ w1 + b1, 0.0)
    h2 = jnp.maximum(h1 @ w2 + b2, 0.0)
    return h2 @ w3 + b3


if __name__ == "__main__":
    B, OBS_DIM, ACT_DIM = 8, 6, 4

    key = jax.random.PRNGKey(0)
    key, k_obs, k_act, k_par = jax.random.split(key, 4)
    obs = jax.random.normal(k_obs, (B, OBS_DIM), jnp.float32)
    action = jax.random.normal(k_act, (B, ACT_DIM), jnp.float32)
    params = init_params(k_par, OBS_DIM, ACT_DIM)

    # Small-batch path (single full-array block).
    out = jax.block_until_ready(qnet_forward(action, obs, params))
    ref = qnet_reference(action, obs, params)
    assert out.shape == (B, 1)
    assert jnp.allclose(out, ref, atol=1e-5, rtol=1e-5)

    # Tiled path: 2 balanced grid steps with a ragged tail (300 -> 256 + 44).
    B2 = 300
    key, k_obs2, k_act2 = jax.random.split(key, 3)
    obs2 = jax.random.normal(k_obs2, (B2, OBS_DIM), jnp.float32)
    act2 = jax.random.normal(k_act2, (B2, ACT_DIM), jnp.float32)
    out2 = jax.block_until_ready(qnet_forward(act2, obs2, params))
    ref2 = qnet_reference(act2, obs2, params)
    assert out2.shape == (B2, 1)
    assert jnp.allclose(out2, ref2, atol=1e-5, rtol=1e-5)

    # Small explicit tile -> 3 grid steps (128, 128, 44 ragged).
    out3 = jax.block_until_ready(qnet_forward(act2, obs2, params, block_batch=128))
    assert out3.shape == (B2, 1)
    assert jnp.allclose(out3, ref2, atol=1e-5, rtol=1e-5)

    print("KERNEL_OK")
</pallas_src>

<mosaic_0001>
module attributes {stable_mosaic.version = 11 : i64} {
  func.func @qnet_kernel(%arg0: i32, %arg1: memref<6x8xf32, #tpu.memory_space<vmem>>, %arg2: memref<4x8xf32, #tpu.memory_space<vmem>>, %arg3: memref<10x6xf32, #tpu.memory_space<vmem>>, %arg4: memref<10x4xf32, #tpu.memory_space<vmem>>, %arg5: memref<10x1xf32, #tpu.memory_space<vmem>>, %arg6: memref<10x10xf32, #tpu.memory_space<vmem>>, %arg7: memref<10x1xf32, #tpu.memory_space<vmem>>, %arg8: memref<1x10xf32, #tpu.memory_space<vmem>>, %arg9: memref<1xf32, #tpu.memory_space<smem>>, %arg10: memref<1x8xf32, #tpu.memory_space<vmem>>) attributes {dimension_semantics = [#tpu.dimension_semantics<parallel>], iteration_bounds = array<i64: 1>, scalar_prefetch = 0 : i64, scratch_operands = 0 : i64, tpu.core_type = #tpu.core_type<tc>, window_params = [{transform_indices = @transform_0, window_bounds = array<i64: 6, 8>}, {transform_indices = @transform_1, window_bounds = array<i64: 4, 8>}, {pipeline_mode = #tpu.pipeline_mode<synchronous>, transform_indices = @transform_2, window_bounds = array<i64: 10, 6>}, {pipeline_mode = #tpu.pipeline_mode<synchronous>, transform_indices = @transform_3, window_bounds = array<i64: 10, 4>}, {pipeline_mode = #tpu.pipeline_mode<synchronous>, transform_indices = @transform_4, window_bounds = array<i64: 10, 1>}, {pipeline_mode = #tpu.pipeline_mode<synchronous>, transform_indices = @transform_5, window_bounds = array<i64: 10, 10>}, {pipeline_mode = #tpu.pipeline_mode<synchronous>, transform_indices = @transform_6, window_bounds = array<i64: 10, 1>}, {pipeline_mode = #tpu.pipeline_mode<synchronous>, transform_indices = @transform_7, window_bounds = array<i64: 1, 10>}, {transform_indices = @transform_8, window_bounds = array<i64: 1>}, {transform_indices = @transform_9, window_bounds = array<i64: 1, 8>}]} {
    %c0 = arith.constant 0 : index
    %c0_0 = arith.constant 0 : index
    %0 = vector.load %arg3[%c0, %c0_0] : memref<10x6xf32, #tpu.memory_space<vmem>>, vector<10x6xf32>
    %c0_1 = arith.constant 0 : index
    %c0_2 = arith.constant 0 : index
    %1 = vector.load %arg1[%c0_1, %c0_2] : memref<6x8xf32, #tpu.memory_space<vmem>>, vector<6x8xf32>
    %cst = arith.constant dense<0.000000e+00> : vector<10x8xf32>
    %2 = tpu.matmul %0, %1, %cst {dimension_numbers = #tpu.dot_dimension_numbers<[1], [0], [0], [1], [0, 0, 1, 1], [], []>} : vector<10x6xf32>, vector<6x8xf32>, vector<10x8xf32> -> vector<10x8xf32>
    %c0_3 = arith.constant 0 : index
    %c0_4 = arith.constant 0 : index
    %3 = vector.load %arg4[%c0_3, %c0_4] : memref<10x4xf32, #tpu.memory_space<vmem>>, vector<10x4xf32>
    %c0_5 = arith.constant 0 : index
    %c0_6 = arith.constant 0 : index
    %4 = vector.load %arg2[%c0_5, %c0_6] : memref<4x8xf32, #tpu.memory_space<vmem>>, vector<4x8xf32>
    %cst_7 = arith.constant dense<0.000000e+00> : vector<10x8xf32>
    %5 = tpu.matmul %3, %4, %cst_7 {dimension_numbers = #tpu.dot_dimension_numbers<[1], [0], [0], [1], [0, 0, 1, 1], [], []>} : vector<10x4xf32>, vector<4x8xf32>, vector<10x8xf32> -> vector<10x8xf32>
    %6 = arith.addf %2, %5 : vector<10x8xf32>
    %c0_8 = arith.constant 0 : index
    %c0_9 = arith.constant 0 : index
    %7 = vector.load %arg5[%c0_8, %c0_9] : memref<10x1xf32, #tpu.memory_space<vmem>>, vector<10x1xf32>
    %8 = vector.broadcast %7 : vector<10x1xf32> to vector<10x8xf32>
    %9 = arith.addf %6, %8 : vector<10x8xf32>
    %cst_10 = arith.constant 0.000000e+00 : f32
    %10 = vector.broadcast %cst_10 : f32 to vector<10x8xf32>
    %11 = arith.maximumf %9, %10 : vector<10x8xf32>
    %c0_11 = arith.constant 0 : index
    %c0_12 = arith.constant 0 : index
    %12 = vector.load %arg6[%c0_11, %c0_12] : memref<10x10xf32, #tpu.memory_space<vmem>>, vector<10x10xf32>
    %cst_13 = arith.constant dense<0.000000e+00> : vector<10x8xf32>
    %13 = tpu.matmul %12, %11, %cst_13 {dimension_numbers = #tpu.dot_dimension_numbers<[1], [0], [0], [1], [0, 0, 1, 1], [], []>} : vector<10x10xf32>, vector<10x8xf32>, vector<10x8xf32> -> vector<10x8xf32>
    %c0_14 = arith.constant 0 : index
    %c0_15 = arith.constant 0 : index
    %14 = vector.load %arg7[%c0_14, %c0_15] : memref<10x1xf32, #tpu.memory_space<vmem>>, vector<10x1xf32>
    %15 = vector.broadcast %14 : vector<10x1xf32> to vector<10x8xf32>
    %16 = arith.addf %13, %15 : vector<10x8xf32>
    %cst_16 = arith.constant 0.000000e+00 : f32
    %17 = vector.broadcast %cst_16 : f32 to vector<10x8xf32>
    %18 = arith.maximumf %16, %17 : vector<10x8xf32>
    %c0_17 = arith.constant 0 : index
    %c0_18 = arith.constant 0 : index
    %19 = vector.load %arg8[%c0_17, %c0_18] : memref<1x10xf32, #tpu.memory_space<vmem>>, vector<1x10xf32>
    %cst_19 = arith.constant dense<0.000000e+00> : vector<1x8xf32>
    %20 = tpu.matmul %19, %18, %cst_19 {dimension_numbers = #tpu.dot_dimension_numbers<[1], [0], [0], [1], [0, 0, 1, 1], [], []>} : vector<1x10xf32>, vector<10x8xf32>, vector<1x8xf32> -> vector<1x8xf32>
    %c0_20 = arith.constant 0 : index
    %21 = memref.load %arg9[%c0_20] : memref<1xf32, #tpu.memory_space<smem>>
    %22 = vector.broadcast %21 : f32 to vector<1x8xf32>
    %23 = arith.addf %20, %22 : vector<1x8xf32>
    %c0_21 = arith.constant 0 : index
    %c0_22 = arith.constant 0 : index
    %24 = vector.load %arg10[%c0_21, %c0_22] : memref<1x8xf32, #tpu.memory_space<vmem>>, vector<1x8xf32>
    tpu.vector_store %arg10[%c0_21, %c0_22], %23 {strides = array<i32>} : memref<1x8xf32, #tpu.memory_space<vmem>>, vector<1x8xf32>,
    return
  }
  func.func @transform_0(%arg0: i32) -> (i32, i32) {
    %c0_i32 = arith.constant 0 : i32
    %c0_i32_0 = arith.constant 0 : i32
    return %c0_i32, %arg0 : i32, i32
  }
  func.func @transform_1(%arg0: i32) -> (i32, i32) {
    %c0_i32 = arith.constant 0 : i32
    %c0_i32_0 = arith.constant 0 : i32
    return %c0_i32, %arg0 : i32, i32
  }
  func.func @transform_2(%arg0: i32) -> (i32, i32) {
    %c0_i32 = arith.constant 0 : i32
    %c0_i32_0 = arith.constant 0 : i32
    %c0_i32_1 = arith.constant 0 : i32
    return %c0_i32, %c0_i32_0 : i32, i32
  }
  func.func @transform_3(%arg0: i32) -> (i32, i32) {
    %c0_i32 = arith.constant 0 : i32
    %c0_i32_0 = arith.constant 0 : i32
    %c0_i32_1 = arith.constant 0 : i32
    return %c0_i32, %c0_i32_0 : i32, i32
  }
  func.func @transform_4(%arg0: i32) -> (i32, i32) {
    %c0_i32 = arith.constant 0 : i32
    %c0_i32_0 = arith.constant 0 : i32
    %c0_i32_1 = arith.constant 0 : i32
    return %c0_i32, %c0_i32_0 : i32, i32
  }
  func.func @transform_5(%arg0: i32) -> (i32, i32) {
    %c0_i32 = arith.constant 0 : i32
    %c0_i32_0 = arith.constant 0 : i32
    %c0_i32_1 = arith.constant 0 : i32
    return %c0_i32, %c0_i32_0 : i32, i32
  }
  func.func @transform_6(%arg0: i32) -> (i32, i32) {
    %c0_i32 = arith.constant 0 : i32
    %c0_i32_0 = arith.constant 0 : i32
    %c0_i32_1 = arith.constant 0 : i32
    return %c0_i32, %c0_i32_0 : i32, i32
  }
  func.func @transform_7(%arg0: i32) -> (i32, i32) {
    %c0_i32 = arith.constant 0 : i32
    %c0_i32_0 = arith.constant 0 : i32
    %c0_i32_1 = arith.constant 0 : i32
    return %c0_i32, %c0_i32_0 : i32, i32
  }
  func.func @transform_8(%arg0: i32) -> i32 {
    %c0_i32 = arith.constant 0 : i32
    %c0_i32_0 = arith.constant 0 : i32
    return %c0_i32 : i32
  }
  func.func @transform_9(%arg0: i32) -> (i32, i32) {
    %c0_i32 = arith.constant 0 : i32
    %c0_i32_0 = arith.constant 0 : i32
    return %c0_i32, %arg0 : i32, i32
  }
}

</mosaic_0001>

<llo_original>
// kernel: qnet_forward.1
$region0: #{qnet_forward.1}
  #allocation0 [shape = 'u32[]', space=smem, size = 0x4, offset = 0x4, fixed_abs, tag = 'smem constant byte address 0x4 - core index']
  #allocation1 [shape = 'u32[72,128]{1,0:T(1,128)}', space=vmem, size = 0x9000, scoped, tag = 'internal scratch']
  #allocation2 [shape = 'f32[1]{0:T(128)S(6)}', space=smem, size = 0x200, scoped, tag = 'scoped memory for qnet_forward.1']
  %s0 = inlined_call_operand.vmem [shape: f32[6,8], index: 0, kind: input, shape index: {}]
  %s1 = inlined_call_operand.vmem [shape: f32[4,8], index: 1, kind: input, shape index: {}]
  %s2 = inlined_call_operand.vmem [shape: f32[10,6], index: 2, kind: input, shape index: {}]
  %s3 = inlined_call_operand.vmem [shape: f32[10,4], index: 3, kind: input, shape index: {}]
  %s4 = inlined_call_operand.vmem [shape: f32[10,1], index: 4, kind: input, shape index: {}]
  %s5 = inlined_call_operand.vmem [shape: f32[10,10], index: 5, kind: input, shape index: {}]
  %s6 = inlined_call_operand.vmem [shape: f32[10,1], index: 6, kind: input, shape index: {}]
  %s7 = inlined_call_operand.vmem [shape: f32[1,10], index: 7, kind: input, shape index: {}]
  %s8 = inlined_call_operand.<no memory space> [shape: f32[1], index: 8, kind: input, shape index: {}]
  %s9 = inlined_call_operand.hbm [shape: f32[1,8], index: 9, kind: output, shape index: {}]
  %s10 = sld [smem:[#allocation0]]
  $region46: #{qnet_forward.1} parent=0
    _
  %s12 = ssub.s32 1, %s10
  %s13 = scalar_select 0, %s12, %s10
  %14 = sst [smem:[#allocation2]] %s8
  $region1: #{qnet_forward.1} parent=0
    #allocation3 [shape = 'u8[512]{0}', space=vmem, size = 0x400, scoped, tag = 'output window, operand 0, single buffered']
    #allocation4 [shape = 's32[1]{0}', space=sflag, size = 0x4, scoped, tag = 'scoped memory for qnet_forward.1']
    %15 = vsyncpa [#allocation4], 0
    // Predicated region
    $region2: #{qnet_forward.1} parent=1 // pred_check
      _
    $region3: #{qnet_forward.1} parent=1 // pred_check_branch
      %17 = sbr.rel (0) target = $region5
    $region4: #{qnet_forward.1} parent=1 // pred_region
      _
    $region5: #{qnet_forward.1} parent=1 // pred_fallthru
      _
    // Predicated region
    $region6: #{qnet_forward.1} parent=1 // pred_check
      _
    $region7: #{qnet_forward.1} parent=1 // pred_check_branch
      %19 = sbr.rel (0) target = $region9
    $region8: #{qnet_forward.1} parent=1 // pred_region
      _
    $region9: #{qnet_forward.1} parent=1 // pred_fallthru
      _
    // Predicated region
    $region10: #{qnet_forward.1} parent=1 // pred_check
      _
    $region11: #{qnet_forward.1} parent=1 // pred_check_branch
      %21 = sbr.rel (0) target = $region13
    $region12: #{qnet_forward.1} parent=1 // pred_region
      _
    $region13: #{qnet_forward.1} parent=1 // pred_fallthru
      _
    // Predicated region
    $region14: #{qnet_forward.1} parent=1 // pred_check
      _
    $region15: #{qnet_forward.1} parent=1 // pred_check_branch
      %23 = sbr.rel (0) target = $region17
    $region16: #{qnet_forward.1} parent=1 // pred_region
      _
    $region17: #{qnet_forward.1} parent=1 // pred_fallthru
      _
    // Predicated region
    $region18: #{qnet_forward.1} parent=1 // pred_check
      _
    $region19: #{qnet_forward.1} parent=1 // pred_check_branch
      %25 = sbr.rel (0) target = $region21
    $region20: #{qnet_forward.1} parent=1 // pred_region
      _
    $region21: #{qnet_forward.1} parent=1 // pred_fallthru
      _
    // Predicated region
    $region22: #{qnet_forward.1} parent=1 // pred_check
      _
    $region23: #{qnet_forward.1} parent=1 // pred_check_branch
      %27 = sbr.rel (0) target = $region25
    $region24: #{qnet_forward.1} parent=1 // pred_region
      _
    $region25: #{qnet_forward.1} parent=1 // pred_fallthru
      _
    // Predicated region
    $region26: #{qnet_forward.1} parent=1 // pred_check
      _
    $region27: #{qnet_forward.1} parent=1 // pred_check_branch
      %29 = sbr.rel (0) target = $region29
    $region28: #{qnet_forward.1} parent=1 // pred_region
      _
    $region29: #{qnet_forward.1} parent=1 // pred_fallthru
      _
    // Predicated region
    $region30: #{qnet_forward.1} parent=1 // pred_check
      _
    $region31: #{qnet_forward.1} parent=1 // pred_check_branch
      %31 = sbr.rel (0) target = $region33
    $region32: #{qnet_forward.1} parent=1 // pred_region
      _
    $region33: #{qnet_forward.1} parent=1 // pred_fallthru
      _
    // Predicated region
    $region34: #{qnet_forward.1} parent=1 // pred_check
      _
    $region35: #{qnet_forward.1} parent=1 // pred_check_branch
      %33 = sbr.rel (0) target = $region37
    $region36: #{qnet_forward.1} parent=1 // pred_region
      _
    $region37: #{qnet_forward.1} parent=1 // pred_fallthru
      _
    %v34 = vld [vmem:[%s2] sm:$0xff]
    %v35 = vld [vmem:[%s2 + $0x8] sm:$0x3]
    %v36 = vld [vmem:[%s0] sm:$0x3f]
    %v37 = vld [vmem:[%s3] sm:$0xff]
    %v38 = vld [vmem:[%s3 + $0x8] sm:$0x3]
    %v39 = vld [vmem:[%s1] sm:$0xf]
    %vm40 = vcmask 31744
    %v42 = vsel %vm40, %v37, 0
    %v45 = vsel %vm40, %v38, 0
    %vm47 = vcmask 1043456
    %v49 = vsel %vm47, %v39, 0
    %51 = vmatpush.msra.mxu0 0.0
    %52 = vmatpush.msra.mxu0 0.0
    %53 = vmatpush.msra.mxu0 0.0
    %54 = vmatpush.msra.mxu0 0.0
    %55 = vmatpush.msra.mxu0 0.0
    %56 = vmatpush.msra.mxu0 0.0
    %57 = vmatpush.msra.mxu0 0.0
    %58 = vmatpush.msra.mxu0 0.0
    %59 = vmatpush.msra.mxu0 0.0
    %60 = vmatpush.msra.mxu0 0.0
    %61 = vmatpush.msra.mxu0 0.0
    %62 = vmatpush.msra.mxu0 0.0
    %63 = vmatpush.msra.mxu0 0.0
    %64 = vmatpush.msra.mxu0 0.0
    %65 = vmatpush.msra.mxu0 0.0
    %66 = vmatpush.msra.mxu0 %v49
    %67 = vmatmul.f32.gmra.mxu0 %v42
    %v68 = vpop.f32.mrf.mxu0
    %v69 = vadd.f32 0.0, %v68
    %70 = vmatmul.f32.gmra.mxu0 %v45
    %v71 = vpop.f32.mrf.mxu0
    %v72 = vadd.f32 0.0, %v71
    %73 = vdwg.mxu0
    %vm74 = vcmask 48128
    %v76 = vsel %vm74, %v34, 0
    %v79 = vsel %vm74, %v35, 0
    %vm81 = vcmask 1045504
    %v83 = vsel %vm81, %v36, 0
    %85 = vmatpush.msra.mxu0 0.0
    %86 = vmatpush.msra.mxu0 0.0
    %87 = vmatpush.msra.mxu0 0.0
    %88 = vmatpush.msra.mxu0 0.0
    %89 = vmatpush.msra.mxu0 0.0
    %90 = vmatpush.msra.mxu0 0.0
    %91 = vmatpush.msra.mxu0 0.0
    %92 = vmatpush.msra.mxu0 0.0
    %93 = vmatpush.msra.mxu0 0.0
    %94 = vmatpush.msra.mxu0 0.0
    %95 = vmatpush.msra.mxu0 0.0
    %96 = vmatpush.msra.mxu0 0.0
    %97 = vmatpush.msra.mxu0 0.0
    %98 = vmatpush.msra.mxu0 0.0
    %99 = vmatpush.msra.mxu0 0.0
    %100 = vmatpush.msra.mxu0 %v83
    %101 = vmatmul.f32.gmra.mxu0 %v76
    %v102 = vpop.f32.mrf.mxu0
    %v103 = vadd.f32 %v69, %v102
    %104 = vmatmul.f32.gmra.mxu0 %v79
    %v105 = vpop.f32.mrf.mxu0
    %v106 = vadd.f32 %v72, %v105
    %107 = vdwg.mxu0
    %v108 = vld [vmem:[%s4] sm:$0xff]
    %v109 = vld [vmem:[%s4 + $0x8] sm:$0x3]
    %111 = vset.pattern.permute.xlu0 0
    %112 = vperm.xlu0 %111, %v108
    %v113 = vpop.permute.xlu0 %112
    %116 = vset.pattern.permute.xlu0 0
    %117 = vperm.xlu0 %116, %v109
    %v118 = vpop.permute.xlu0 %117
    %v120 = vadd.f32 %v103, %v113
    %v121 = vadd.f32 %v106, %v118
    %v122 = vmax.f32 %v120, 0.0
    %v123 = vmax.f32 %v121, 0.0
    %v124 = vld [vmem:[%s5] sm:$0xff]
    %v125 = vld [vmem:[%s5 + $0x8] sm:$0x3]
    %v126 = vld [vmem:[%s6] sm:$0xff]
    %v127 = vld [vmem:[%s6 + $0x8] sm:$0x3]
    %129 = vset.pattern.permute.xlu0 0
    %130 = vperm.xlu0 %129, %v126
    %v131 = vpop.permute.xlu0 %130
    %134 = vset.pattern.permute.xlu0 0
    %135 = vperm.xlu0 %134, %v127
    %v136 = vpop.permute.xlu0 %135
    %vm138 = vcmask 80896
    %v140 = vsel %vm138, %v124, 0
    %v143 = vsel %vm138, %v125, 0
    %vm145 = vcmask 1041408
    %v147 = vsel %vm145, %v123, 0
    %149 = vmatpush.msra.mxu0 0.0
    %150 = vmatpush.msra.mxu0 0.0
    %151 = vmatpush.msra.mxu0 0.0
    %152 = vmatpush.msra.mxu0 0.0
    %153 = vmatpush.msra.mxu0 0.0
    %154 = vmatpush.msra.mxu0 0.0
    %155 = vmatpush.msra.mxu0 0.0
    %156 = vmatpush.msra.mxu0 0.0
    %157 = vmatpush.msra.mxu0 0.0
    %158 = vmatpush.msra.mxu0 0.0
    %159 = vmatpush.msra.mxu0 0.0
    %160 = vmatpush.msra.mxu0 0.0
    %161 = vmatpush.msra.mxu0 0.0
    %162 = vmatpush.msra.mxu0 0.0
    %163 = vmatpush.msra.mxu0 %v147
    %164 = vmatpush.msra.mxu0 %v122
    %165 = vmatmul.f32.gmra.mxu0 %v140
    %v166 = vpop.f32.mrf.mxu0
    %v167 = vadd.f32 %v131, %v166
    %168 = vmatmul.f32.gmra.mxu0 %v143
    %v169 = vpop.f32.mrf.mxu0
    %v170 = vadd.f32 %v136, %v169
    %171 = vdwg.mxu0
    %v172 = vmax.f32 %v167, 0.0
    %v173 = vmax.f32 %v170, 0.0
    %v174 = vld [vmem:[%s7] sm:$0x1]
    %s175 = sld [smem:[#allocation2]]
    %v176 = vstv %s175
    %v178 = vsel %vm138, %v174, 0
    %v181 = vsel %vm145, %v173, 0
    %183 = vmatpush.msra.mxu0 0.0
    %184 = vmatpush.msra.mxu0 0.0
    %185 = vmatpush.msra.mxu0 0.0
    %186 = vmatpush.msra.mxu0 0.0
    %187 = vmatpush.msra.mxu0 0.0
    %188 = vmatpush.msra.mxu0 0.0
    %189 = vmatpush.msra.mxu0 0.0
    %190 = vmatpush.msra.mxu0 0.0
    %191 = vmatpush.msra.mxu0 0.0
    %192 = vmatpush.msra.mxu0 0.0
    %193 = vmatpush.msra.mxu0 0.0
    %194 = vmatpush.msra.mxu0 0.0
    %195 = vmatpush.msra.mxu0 0.0
    %196 = vmatpush.msra.mxu0 0.0
    %197 = vmatpush.msra.mxu0 %v181
    %198 = vmatpush.msra.mxu0 %v172
    %199 = vmatmul.f32.gmra.mxu0 %v178
    %v200 = vpop.f32.mrf.mxu0
    %v201 = vadd.f32 %v176, %v200
    %202 = vdwg.mxu0
    %vm203 = vcmask 57344
    %204 = vst.msk [vmem:[#allocation3] sm:$0x1] %vm203, %v201
    // Predicated region
    $region38: #{qnet_forward.1} parent=1 // pred_check
      _
    $region39: #{qnet_forward.1} parent=1 // pred_check_branch
      %206 = sbr.rel (0) target = $region41
    $region40: #{qnet_forward.1} parent=1 // pred_region
      %208 = vsyncadd [#allocation4], 0
      %s210 = sshll.u32 [#allocation3], 4
      %s211 = int_to_ptr.vmem [resolvable:$true] %s210
      %s212 = sshll.u32 %s9, 4
      %s213 = int_to_ptr.hbm [resolvable:$true] %s212
      %215 = dma.vmem_to_hbm [thread:$0]  %s211, 16, %s213, [#allocation4]
    $region41: #{qnet_forward.1} parent=1 // pred_fallthru
      _
    // Predicated region
    $region42: #{qnet_forward.1} parent=1 // pred_check
      _
    $region43: #{qnet_forward.1} parent=1 // pred_check_branch
      %217 = sbr.rel (0) target = $region45
    $region44: #{qnet_forward.1} parent=1 // pred_region
      %219 = dma.done [#allocation4], 16
    $region45: #{qnet_forward.1} parent=1 // pred_fallthru
      _
    %220 = vsyncpa [#allocation4], 1

</llo_original>
